<compile_context>
chip_gen: v6e
topology: v6e:2x2x1
jax: 0.10.0
libtpu: 0.0.40
codegen_flags: <defaults>
</compile_context>

<pallas_src>
import math

import jax
import jax.numpy as jnp
from jax.experimental import pallas as pl
from jax.experimental.pallas import tpu as pltpu


# --------------------------------- kernels ----------------------------------

def _scale_kernel(scale_ref, x_ref, o_ref):
    """o = scale * x.  scale_ref: (TB, 1); x_ref/o_ref: (TB, TN)."""
    o_ref[...] = x_ref[...] * scale_ref[...]


def _scale_add_kernel(scale_ref, x_ref, res_ref, o_ref):
    """Fused residual add: o = residual + scale * x (one HBM pass)."""
    o_ref[...] = res_ref[...] + x_ref[...] * scale_ref[...]


# ------------------------------- tiling logic --------------------------------

_TARGET_BLOCK_BYTES = 4 * 1024 * 1024  # ~4 MiB/block: HBM-roofline plateau on v5e/v6e/v7x


def _sublane_pack(itemsize):
    """Native sublane packing: 8 for f32, 16 for bf16, 32 for int8/fp8."""
    return max(8, 32 // itemsize)


def _largest_aligned_divisor(n, unit, cap):
    """Largest d with d % unit == 0, d | n, d <= cap.  Requires n % unit == 0, cap >= unit."""
    q = n // unit
    best = unit
    i = 1
    while i * i <= q:
        if q % i == 0:
            for f in (i, q // i):
                cand = f * unit
                if best < cand <= cap:
                    best = cand
        i += 1
    return best


def _row_layout(B, feat, itemsize):
    """View (B, feat) as (rows, lanes); per-sample scale repeats `rep` times.

    When B is not a multiple of the dtype's sublane packing, fold features into
    the sublane axis so tiles stay (sub, 128)-dense (small-batch fallback)."""
    sub = _sublane_pack(itemsize)
    rows, lanes, rep = B, feat, 1
    if feat % 128 == 0 and B % sub != 0:
        q = feat // 128
        divisors = set()
        i = 1
        while i * i <= q:
            if q % i == 0:
                divisors.add(i)
                divisors.add(q // i)
            i += 1
        for d in sorted(divisors, reverse=True):       # prefer widest lane dim
            L = d * 128
            if (B * (feat // L)) % sub == 0:
                lanes = L
                rep = feat // L
                rows = B * rep
                break
    return rows, lanes, rep


def _choose_tiles(rows, lanes, itemsize, target_bytes=_TARGET_BLOCK_BYTES):
    sub = _sublane_pack(itemsize)

    # Lane tile: multiple of 128 dividing `lanes` (lane-exact -> unmasked vst).
    if lanes <= 128:
        TN = lanes
    elif lanes % 128 == 0:
        cap = max(128, (target_bytes // (sub * itemsize)) // 128 * 128)
        TN = _largest_aligned_divisor(lanes, 128, cap)
    else:
        # Ragged feature dim: padded (masked) last lane-block — correct, rare.
        cap = max(128, (target_bytes // (sub * itemsize)) // 128 * 128)
        TN = min(cap, pl.cdiv(lanes, 128) * 128)

    # Sublane tile: multiple of the dtype packing dividing `rows`, sized so
    # TB*TN*itemsize ≈ target_bytes.
    if rows <= sub:
        TB = rows
    elif rows % sub == 0:
        cap = max(sub, (target_bytes // (TN * itemsize)) // sub * sub)
        TB = _largest_aligned_divisor(rows, sub, cap)
    else:
        cap = max(sub, (target_bytes // (TN * itemsize)) // sub * sub)
        TB = min(cap, pl.cdiv(rows, sub) * sub)

    # v7x has 2 TensorCores: never hand the whole tensor to one grid block if
    # it can be split along a "parallel" axis.
    if pl.cdiv(rows, TB) * pl.cdiv(lanes, TN) == 1:
        if rows % sub == 0 and rows >= 2 * sub:
            TB = _largest_aligned_divisor(rows, sub, max(sub, TB // 2))
        elif lanes % 128 == 0 and lanes >= 2 * 128:
            TN = _largest_aligned_divisor(lanes, 128, max(128, TN // 2))
    return TB, TN


# ------------------------------- core wrapper --------------------------------

def _apply_per_sample_scale(x, scale, residual=None):
    """out = (residual or 0) + scale[b] * x[b, ...] — single Pallas streaming pass."""
    orig_shape = x.shape
    B = x.shape[0]
    feat = math.prod(x.shape[1:]) if x.ndim > 1 else 1
    itemsize = jnp.dtype(x.dtype).itemsize

    rows, lanes, rep = _row_layout(B, feat, itemsize)
    TB, TN = _choose_tiles(rows, lanes, itemsize)
    grid = (pl.cdiv(rows, TB), pl.cdiv(lanes, TN))

    scale_col = scale.astype(x.dtype)
    if rep > 1:
        scale_col = jnp.repeat(scale_col, rep)          # tiny: rows values
    scale_col = scale_col.reshape(rows, 1)

    x2 = x.reshape(rows, lanes)
    operands = [scale_col, x2]
    in_specs = [
        pl.BlockSpec((TB, 1), lambda i, j: (i, 0)),      # per-row scale column
        pl.BlockSpec((TB, TN), lambda i, j: (i, j)),     # x tile
    ]
    if residual is None:
        kernel = _scale_kernel
        aliases = {1: 0}        # reuse x's buffer for the output
        n_streams = 2           # x in + out
    else:
        kernel = _scale_add_kernel
        operands.append(residual.reshape(rows, lanes))
        in_specs.append(pl.BlockSpec((TB, TN), lambda i, j: (i, j)))
        aliases = {2: 0}        # reuse residual's buffer for the output
        n_streams = 3           # x + residual in + out

    # Explicit VMEM budget: double-buffered streams + scale + headroom, so the
    # v5e 16 MiB scoped default never caps the block size.
    block_bytes = TB * TN * itemsize
    vmem_limit = int(2 * (n_streams * block_bytes + TB * itemsize) + (2 << 20))
    vmem_limit = max(vmem_limit, 8 << 20)

    out2 = pl.pallas_call(
        kernel,
        out_shape=jax.ShapeDtypeStruct((rows, lanes), x.dtype),
        grid_spec=pltpu.PrefetchScalarGridSpec(
            num_scalar_prefetch=0,
            grid=grid,
            in_specs=in_specs,
            out_specs=pl.BlockSpec((TB, TN), lambda i, j: (i, j)),
        ),
        compiler_params=pltpu.CompilerParams(
            dimension_semantics=("parallel", "parallel"),
            vmem_limit_bytes=vmem_limit),
        input_output_aliases=aliases,
    )(*operands)

    return out2.reshape(orig_shape)


def _per_sample_scale(key, B, keep_prob, dtype):
    """floor(keep_prob + U[0,1)) / keep_prob per sample — tiny, done in plain JAX."""
    u = jax.random.uniform(key, (B,), dtype=jnp.float32)
    return (jnp.floor(keep_prob + u) / keep_prob).astype(dtype)


def drop_path_pallas(x, drop_prob: float, *, training: bool, key):
    """Exact semantics of the reference drop_path()."""
    if drop_prob == 0.0 or not training:
        return x
    keep_prob = 1.0 - drop_prob
    scale = _per_sample_scale(key, x.shape[0], keep_prob, x.dtype)
    return _apply_per_sample_scale(x, scale)


def drop_path_add_pallas(residual, x, drop_prob: float, *, training: bool, key):
    """residual + drop_path(x): fused form ConvNext residual blocks should use."""
    B = x.shape[0]
    if drop_prob == 0.0 or not training:
        scale = jnp.ones((B,), x.dtype)
    else:
        keep_prob = 1.0 - drop_prob
        scale = _per_sample_scale(key, B, keep_prob, x.dtype)
    return _apply_per_sample_scale(x, scale, residual=residual)


class ConvNextDropPath:
    """Drop paths (Stochastic Depth) per sample — Pallas/TPU implementation."""

    def __init__(self, drop_prob=None):
        self.drop_prob = drop_prob if drop_prob is not None else 0.0
        self.training = True

    def __call__(self, hidden_states, key):
        return drop_path_pallas(hidden_states, self.drop_prob,
                                training=self.training, key=key)


if __name__ == "__main__":
    root = jax.random.PRNGKey(0)
    k_x, k_res, k_mask = jax.random.split(root, 3)

    # NCHW input, small shapes consistent with a ConvNext feature map.
    B, C, H, W = 2, 4, 16, 16
    x = jax.random.normal(k_x, (B, C, H, W), dtype=jnp.float32)

    module = ConvNextDropPath(drop_prob=0.2)
    module.training = True

    out = jax.block_until_ready(module(x, k_mask))

    # Pure-JAX reference with identical randomness.
    keep_prob = 1.0 - module.drop_prob
    u = jax.random.uniform(k_mask, (B,), dtype=jnp.float32)
    mask = jnp.floor(keep_prob + u).reshape(B, 1, 1, 1)
    ref = x / keep_prob * mask
    assert jnp.allclose(out, ref, atol=1e-6, rtol=1e-5), "drop_path mismatch"

    # bf16 path (native-dtype multiply, dtype-aware sublane packing).
    x_bf16 = x.astype(jnp.bfloat16)
    out_bf16 = jax.block_until_ready(module(x_bf16, k_mask))
    scale_bf16 = (jnp.floor(keep_prob + u) / keep_prob).astype(jnp.bfloat16)
    ref_bf16 = x_bf16 * scale_bf16.reshape(B, 1, 1, 1)
    assert out_bf16.dtype == jnp.bfloat16
    assert jnp.allclose(out_bf16.astype(jnp.float32),
                        ref_bf16.astype(jnp.float32), atol=1e-2, rtol=1e-2)

    # Fused residual-add path: out = residual + drop_path(x) in one HBM pass.
    residual = jax.random.normal(k_res, (B, C, H, W), dtype=jnp.float32)
    out_fused = jax.block_until_ready(
        drop_path_add_pallas(residual, x, module.drop_prob,
                             training=True, key=k_mask))
    ref_fused = residual + x / keep_prob * mask
    assert jnp.allclose(out_fused, ref_fused, atol=1e-6, rtol=1e-5), "fused mismatch"

    # Eval / drop_prob=0 path is the identity.
    module.training = False
    out_eval = jax.block_until_ready(module(x, k_mask))
    assert jnp.array_equal(out_eval, x)

    print("KERNEL_OK")
</pallas_src>

<mosaic_0001>
module attributes {stable_mosaic.version = 11 : i64} {
  func.func @_scale_kernel(%arg0: i32, %arg1: i32, %arg2: memref<8x1xf32, #tpu.memory_space<vmem>>, %arg3: memref<8x128xf32, #tpu.memory_space<vmem>>, %arg4: memref<8x128xf32, #tpu.memory_space<vmem>>) attributes {dimension_semantics = [#tpu.dimension_semantics<parallel>, #tpu.dimension_semantics<parallel>], iteration_bounds = array<i64: 1, 2>, scalar_prefetch = 0 : i64, scratch_operands = 0 : i64, tpu.core_type = #tpu.core_type<tc>, window_params = [{transform_indices = @transform_0, window_bounds = array<i64: 8, 1>}, {transform_indices = @transform_1, window_bounds = array<i64: 8, 128>}, {transform_indices = @transform_2, window_bounds = array<i64: 8, 128>}]} {
    %c0 = arith.constant 0 : index
    %c0_0 = arith.constant 0 : index
    %0 = vector.load %arg3[%c0, %c0_0] : memref<8x128xf32, #tpu.memory_space<vmem>>, vector<8x128xf32>
    %c0_1 = arith.constant 0 : index
    %c0_2 = arith.constant 0 : index
    %1 = vector.load %arg2[%c0_1, %c0_2] : memref<8x1xf32, #tpu.memory_space<vmem>>, vector<8x1xf32>
    %2 = vector.broadcast %1 : vector<8x1xf32> to vector<8x128xf32>
    %3 = arith.mulf %0, %2 : vector<8x128xf32>
    %c0_3 = arith.constant 0 : index
    %c0_4 = arith.constant 0 : index
    %4 = vector.load %arg4[%c0_3, %c0_4] : memref<8x128xf32, #tpu.memory_space<vmem>>, vector<8x128xf32>
    tpu.vector_store %arg4[%c0_3, %c0_4], %3 {strides = array<i32>} : memref<8x128xf32, #tpu.memory_space<vmem>>, vector<8x128xf32>,
    return
  }
  func.func @transform_0(%arg0: i32, %arg1: i32) -> (i32, i32) {
    %c0_i32 = arith.constant 0 : i32
    %c0_i32_0 = arith.constant 0 : i32
    return %arg0, %c0_i32 : i32, i32
  }
  func.func @transform_1(%arg0: i32, %arg1: i32) -> (i32, i32) {
    %c0_i32 = arith.constant 0 : i32
    return %arg0, %arg1 : i32, i32
  }
  func.func @transform_2(%arg0: i32, %arg1: i32) -> (i32, i32) {
    %c0_i32 = arith.constant 0 : i32
    return %arg0, %arg1 : i32, i32
  }
}

</mosaic_0001>

<llo_original>
// kernel: tpu_custom_call.1
$region0: #{tpu_custom_call.1}
  #allocation0 [shape = 'u32[]', space=smem, size = 0x4, offset = 0x4, fixed_abs, tag = 'smem constant byte address 0x4 - core index']
  #allocation1 [shape = 'u32[144,128]{1,0:T(1,128)}', space=vmem, size = 0x12000, scoped, tag = 'internal scratch']
  %s0 = inlined_call_operand.vmem [shape: f32[8,1], index: 0, kind: input, shape index: {}]
  %s1 = inlined_call_operand.hbm [shape: f32[8,256], index: 1, kind: input, shape index: {}, may-alias: {1,2}]
  %s2 = inlined_call_operand.hbm [shape: f32[8,256], index: 2, kind: output, shape index: {}, may-alias: {1,2}]
  %s3 = sld [smem:[#allocation0]]
  $region45: #{tpu_custom_call.1} parent=0
    _
  %s5 = ssub.s32 1, %s3
  %s6 = scalar_select 0, %s5, %s3
  $region1: #{tpu_custom_call.1} parent=0
    #allocation2 [shape = 'u8[8192]{0}', space=vmem, size = 0x2000, scoped, tag = 'input window, operand 1']
    #allocation3 [shape = 's32[2]{0}', space=sflag, size = 0x8, scoped, tag = 'scoped memory for tpu_custom_call.1']
    #allocation4 [shape = 's32[2]{0}', space=sflag, size = 0x8, scoped, tag = 'scoped memory for tpu_custom_call.1']
    #allocation5 [shape = 'u8[8192]{0}', space=vmem, size = 0x2000, scoped, tag = 'output window, operand 0']
    %7 = vsyncpa [#allocation3], 0
    %s8 = scalar_lea.sflag [#allocation3], 1
    %9 = vsyncpa %s8, 0
    %10 = vsyncpa [#allocation4], 0
    %s11 = scalar_lea.sflag [#allocation4], 1
    %12 = vsyncpa %s11, 0
    loop: start=0, step=1, limit=4
    $region2: #{tpu_custom_call.1} parent=1 // loop_pre_header
      _
    $region3: #{tpu_custom_call.1} parent=1 // loop_header
      %s14 = sphi 0, %s18
      %p15 = scmp.ge.s32.totalorder %s14, 4
      %s21 = sphi 0, %s33
      %s22 = sphi 0, %s29
      %s23 = sphi 0, %s21
      %s24 = sphi 0, %s22
      %s25 = sphi 0, %s23
      %s26 = sphi 0, %s24
      %s36 = sphi 0, %s38
      %s39 = sphi 0, %s36
      %s40 = sphi 0, %s39
      %s56 = sphi 0, %s40
      %s64 = sphi 0, %s66
      %s67 = sphi 0, %s64
      %s68 = sphi 0, %s67
      %s84 = sphi 0, %s68
      %s92 = sphi 0, %s94
      %s95 = sphi 0, %s92
      %s96 = sphi 0, %s95
      %s112 = sphi 0, %s96
    $region4: #{tpu_custom_call.1} parent=1 // loop_header_branch
      %17 = sbr.rel (%p15) target = $region8
    $region5: #{tpu_custom_call.1} parent=1 // loop_body
      %s19 = ssub.s32 %s14, 1
      %s20 = ssub.s32 %s14, 2
      %s27 = sadd.s32 1, %s22
      %p28 = scmp.ge.s32.totalorder %s27, 2
      %s29 = scalar_select %p28, 0, %s27
      %s30 = sadd.s32 1, %s21
      %s31 = scalar_select %p28, %s30, %s21
      %p32 = scmp.ge.s32.totalorder %s31, 1
      %s33 = scalar_select %p32, 0, %s31
      %s34 = ssub.s32 %s21, %s33
      %p35 = scmp.eq.s32.totalorder %s34, 0
      %s37 = sadd.s32 %s36, 1
      %s38 = scalar_select %p35, %s36, %s37
      %p41 = pneg %p35
      %p42 = scmp.eq.s32.totalorder %s14, 1
      %p43 = por %p41, %p42
      %p44 = scmp.ne.s32.totalorder %s36, %s39
      %p45 = scmp.eq.s32.totalorder %s14, 0
      %p46 = por %p44, %p45
      %p47 = scmp.ne.s32.totalorder %s36, %s39
      %p48 = scmp.eq.s32.totalorder %s19, 1
      %p49 = por %p47, %p48
      %p50 = scmp.ne.s32.totalorder %s39, %s40
      %p51 = scmp.eq.s32.totalorder %s19, 0
      %p52 = por %p50, %p51
      %p53 = scmp.ne.s32.totalorder %s39, %s40
      %p54 = scmp.eq.s32.totalorder %s20, 1
      %p55 = por %p53, %p54
      %p57 = scmp.ne.s32.totalorder %s40, %s56
      %p58 = scmp.eq.s32.totalorder %s20, 0
      %p59 = por %p57, %p58
      %s60 = ssub.s32 %s21, %s33
      %s61 = ssub.s32 %s22, %s29
      %s62 = sor.u32 %s60, %s61
      %p63 = scmp.eq.s32.totalorder %s62, 0
      %s65 = sadd.s32 %s64, 1
      %s66 = scalar_select %p63, %s64, %s65
      %p69 = pneg %p63
      %p70 = scmp.eq.s32.totalorder %s14, 1
      %p71 = por %p69, %p70
      %p72 = scmp.ne.s32.totalorder %s64, %s67
      %p73 = scmp.eq.s32.totalorder %s14, 0
      %p74 = por %p72, %p73
      %p75 = scmp.ne.s32.totalorder %s64, %s67
      %p76 = scmp.eq.s32.totalorder %s19, 1
      %p77 = por %p75, %p76
      %p78 = scmp.ne.s32.totalorder %s67, %s68
      %p79 = scmp.eq.s32.totalorder %s19, 0
      %p80 = por %p78, %p79
      %p81 = scmp.ne.s32.totalorder %s67, %s68
      %p82 = scmp.eq.s32.totalorder %s20, 1
      %p83 = por %p81, %p82
      %p85 = scmp.ne.s32.totalorder %s68, %s84
      %p86 = scmp.eq.s32.totalorder %s20, 0
      %p87 = por %p85, %p86
      %s88 = ssub.s32 %s21, %s33
      %s89 = ssub.s32 %s22, %s29
      %s90 = sor.u32 %s88, %s89
      %p91 = scmp.eq.s32.totalorder %s90, 0
      %s93 = sadd.s32 %s92, 1
      %s94 = scalar_select %p91, %s92, %s93
      %p97 = pneg %p91
      %p98 = scmp.eq.s32.totalorder %s14, 1
      %p99 = por %p97, %p98
      %p100 = scmp.ne.s32.totalorder %s92, %s95
      %p101 = scmp.eq.s32.totalorder %s14, 0
      %p102 = por %p100, %p101
      %p103 = scmp.ne.s32.totalorder %s92, %s95
      %p104 = scmp.eq.s32.totalorder %s19, 1
      %p105 = por %p103, %p104
      %p106 = scmp.ne.s32.totalorder %s95, %s96
      %p107 = scmp.eq.s32.totalorder %s19, 0
      %p108 = por %p106, %p107
      %p109 = scmp.ne.s32.totalorder %s95, %s96
      %p110 = scmp.eq.s32.totalorder %s20, 1
      %p111 = por %p109, %p110
      %p113 = scmp.ne.s32.totalorder %s96, %s112
      %p114 = scmp.eq.s32.totalorder %s20, 0
      %p115 = por %p113, %p114
      %p116 = scmp.le.s32.totalorder 1, %s14
      %p117 = scmp.lt.s32.totalorder %s14, 3
      %p118 = pnand %p116, %p117
      %p119 = pneg %p118
      // Predicated region
      $region9: #{tpu_custom_call.1} parent=5 // pred_check
        _
      $region10: #{tpu_custom_call.1} parent=5 // pred_check_branch
        %121 = sbr.rel (%p118) target = $region12
      $region11: #{tpu_custom_call.1} parent=5 // pred_region
        %s122 = ssub.s32 %s14, 1
        // Predicated region
        $region13: #{tpu_custom_call.1} parent=11 // pred_check
          %p123 = pneg %p52
        $region14: #{tpu_custom_call.1} parent=11 // pred_check_branch
          %125 = sbr.rel (%p123) target = $region16
        $region15: #{tpu_custom_call.1} parent=11 // pred_region
          %p126 = scmp.lt.s32.totalorder %s23, 0
          %s127 = scalar_select %p126, %s23, 0
          %s128 = smul.addr %s127, 8
          %s129 = scalar_lea.vmem %s0, %s128
        $region16: #{tpu_custom_call.1} parent=11 // pred_fallthru
          _
      $region12: #{tpu_custom_call.1} parent=5 // pred_fallthru
        _
      %p130 = scmp.lt.s32.totalorder %s14, 2
      // Predicated region
      $region17: #{tpu_custom_call.1} parent=5 // pred_check
        %p131 = pneg %p130
      $region18: #{tpu_custom_call.1} parent=5 // pred_check_branch
        %133 = sbr.rel (%p131) target = $region20
      $region19: #{tpu_custom_call.1} parent=5 // pred_region
        // Predicated region
        $region21: #{tpu_custom_call.1} parent=19 // pred_check
          %p134 = pneg %p74
        $region22: #{tpu_custom_call.1} parent=19 // pred_check_branch
          %136 = sbr.rel (%p134) target = $region24
        $region23: #{tpu_custom_call.1} parent=19 // pred_region
          %s137 = sand.u32 %s64, 1
          %s138 = scalar_lea.sflag [#allocation3], %s137
          %s139 = sand.u32 %s64, 1
          %s140 = smul.addr %s139, 8
          %s141 = scalar_lea.vmem [#allocation2], %s140
          %s143 = ssub.s32 128, 128
          %144 = vsyncadd %s138, %s143
          %s145 = smul.addr %s21, 2
          %s146 = sadd.s32 %s22, %s145
          %s147 = smul.addr %s146, 128
          %s148 = scalar_lea.hbm %s1, %s147
          %s150 = sshll.u32 %s141, 4
          %s151 = int_to_ptr.vmem [resolvable:$true] %s150
          %153 = dma.hbm_to_vmem [thread:$0]  %s148, 128, %s151, %s138
        $region24: #{tpu_custom_call.1} parent=19 // pred_fallthru
          _
      $region20: #{tpu_custom_call.1} parent=5 // pred_fallthru
        _
      %p154 = scmp.le.s32.totalorder 1, %s14
      %p155 = scmp.lt.s32.totalorder %s14, 3
      %p156 = pnand %p154, %p155
      %p157 = pneg %p156
      // Predicated region
      $region25: #{tpu_custom_call.1} parent=5 // pred_check
        _
      $region26: #{tpu_custom_call.1} parent=5 // pred_check_branch
        %159 = sbr.rel (%p156) target = $region28
      $region27: #{tpu_custom_call.1} parent=5 // pred_region
        %s160 = ssub.s32 %s14, 1
        %s161 = sand.u32 %s67, 1
        %s162 = scalar_lea.sflag [#allocation3], %s161
        %s163 = sand.u32 %s67, 1
        %s164 = smul.addr %s163, 8
        %s165 = scalar_lea.vmem [#allocation2], %s164
        // Predicated region
        $region29: #{tpu_custom_call.1} parent=27 // pred_check
          %p166 = pneg %p80
        $region30: #{tpu_custom_call.1} parent=27 // pred_check_branch
          %168 = sbr.rel (%p166) target = $region32
        $region31: #{tpu_custom_call.1} parent=27 // pred_region
          %169 = dma.done %s162, 128
        $region32: #{tpu_custom_call.1} parent=27 // pred_fallthru
          _
        %p170 = scmp.lt.s32.totalorder %s23, 0
        %s171 = scalar_select %p170, %s23, 0
        %s172 = smul.addr %s171, 8
        %s173 = scalar_lea.vmem %s0, %s172
        %p174 = pneg %p52
        %p175 = pneg %p49
        %s176 = sand.u32 %s67, 1
        %s177 = scalar_lea.sflag [#allocation3], %s176
        %s178 = sand.u32 %s67, 1
        %s179 = smul.addr %s178, 8
        %s180 = scalar_lea.vmem [#allocation2], %s179
        %p181 = pneg %p80
        %p182 = pneg %p77
        %p183 = pneg %p108
        %p184 = pneg %p105
        %s185 = sand.u32 %s95, 1
        %s186 = scalar_lea.sflag [#allocation4], %s185
        %s187 = sand.u32 %s95, 1
        %s188 = smul.addr %s187, 8
        %s189 = scalar_lea.vmem [#allocation5], %s188
        %p190 = scmp.lt.s32.totalorder %s23, 0
        %s191 = scalar_select %p190, %s23, 0
        %s192 = smul.addr %s191, 8
        %s193 = scalar_lea.vmem %s0, %s192
        %v194 = vld [vmem:[%s165] sm:$0xff]
        %v195 = vld [vmem:[%s193] sm:$0xff]
        %197 = vset.pattern.permute.xlu0 0
        %198 = vperm.xlu0 %197, %v195
        %v199 = vpop.permute.xlu0 %198
        %v201 = vmul.f32 %v194, %v199
        %202 = vst [vmem:[%s189] sm:$0xff] %v201
        %s203 = sand.u32 %s95, 1
        %s204 = scalar_lea.sflag [#allocation4], %s203
        %s205 = sand.u32 %s95, 1
        %s206 = smul.addr %s205, 8
        %s207 = scalar_lea.vmem [#allocation5], %s206
        // Predicated region
        $region33: #{tpu_custom_call.1} parent=27 // pred_check
          %p208 = pneg %p105
        $region34: #{tpu_custom_call.1} parent=27 // pred_check_branch
          %210 = sbr.rel (%p208) target = $region36
        $region35: #{tpu_custom_call.1} parent=27 // pred_region
          %s212 = ssub.s32 128, 128
          %213 = vsyncadd %s204, %s212
          %s214 = smul.addr %s23, 2
          %s215 = sadd.s32 %s24, %s214
          %s216 = smul.addr %s215, 128
          %s217 = scalar_lea.hbm %s2, %s216
          %s219 = sshll.u32 %s207, 4
          %s220 = int_to_ptr.vmem [resolvable:$true] %s219
          %222 = dma.vmem_to_hbm [thread:$0]  %s220, 128, %s217, %s204
        $region36: #{tpu_custom_call.1} parent=27 // pred_fallthru
          _
      $region28: #{tpu_custom_call.1} parent=5 // pred_fallthru
        _
      %p223 = scmp.le.s32.totalorder 2, %s14
      // Predicated region
      $region37: #{tpu_custom_call.1} parent=5 // pred_check
        %p224 = pneg %p223
      $region38: #{tpu_custom_call.1} parent=5 // pred_check_branch
        %226 = sbr.rel (%p224) target = $region40
      $region39: #{tpu_custom_call.1} parent=5 // pred_region
        %s227 = ssub.s32 %s14, 2
        // Predicated region
        $region41: #{tpu_custom_call.1} parent=39 // pred_check
          %p228 = pneg %p111
        $region42: #{tpu_custom_call.1} parent=39 // pred_check_branch
          %230 = sbr.rel (%p228) target = $region44
        $region43: #{tpu_custom_call.1} parent=39 // pred_region
          %s231 = sand.u32 %s96, 1
          %s232 = scalar_lea.sflag [#allocation4], %s231
          %s233 = sand.u32 %s96, 1
          %s234 = smul.addr %s233, 8
          %s235 = scalar_lea.vmem [#allocation5], %s234
          %236 = dma.done %s232, 128
        $region44: #{tpu_custom_call.1} parent=39 // pred_fallthru
          _
      $region40: #{tpu_custom_call.1} parent=5 // pred_fallthru
        _
    $region6: #{tpu_custom_call.1} parent=1 // loop_footer
      %s18 = sadd.s32 1, %s14
    $region7: #{tpu_custom_call.1} parent=1 // loop_footer_branch
      %13 = sbr.rel target = $region3
    $region8: #{tpu_custom_call.1} parent=1 // loop_exit
      _
    %237 = vsyncpa [#allocation3], 1
    %s238 = scalar_lea.sflag [#allocation3], 1
    %239 = vsyncpa %s238, 1
    %240 = vsyncpa [#allocation4], 1
    %s241 = scalar_lea.sflag [#allocation4], 1
    %242 = vsyncpa %s241, 1

</llo_original>
